<compile_context>
chip_gen: v5e
topology: v5e:2x2
jax: 0.10.0
libtpu: 0.0.40
codegen_flags: <defaults>
</compile_context>

<pallas_src>
import math

import jax
import jax.numpy as jnp
from jax.experimental import pallas as pl
from jax.experimental.pallas import tpu as pltpu


def film_kernel(x_ref, w_ref, b_ref, o_ref):
    # x: (TB, D) bf16, w: (D, 2D) bf16, b: (1, 2D) f32, o: (TB, D).
    D = x_ref.shape[1]
    x = x_ref[...]
    # Single fused MXU pass: [scale | shift] = x @ [Ws^T | Wt^T] + [bs | bt],
    # bf16 inputs, f32 accumulation.
    y = jnp.dot(x, w_ref[...], preferred_element_type=jnp.float32) + b_ref[...]
    scale = y[:, :D]
    shift = y[:, D:]
    xf = x.astype(jnp.float32)            # f32 epilogue on the VPU
    o_ref[...] = (xf * scale + shift).astype(o_ref.dtype)


def prepare_film_params(w_scale, b_scale, w_shift, b_shift,
                        compute_dtype=jnp.bfloat16):
    """One-time parameter prep (hoisted out of the per-call hot path).

    w_*: (D, D) in PyTorch (out, in) convention, b_*: (D,).
    Returns fused (D, 2D) weight in `compute_dtype` and (1, 2D) f32 bias so the
    kernel computes x @ W_fused + b_fused == [x @ Ws^T + bs | x @ Wt^T + bt].
    """
    D = w_scale.shape[0]
    w_fused = jnp.concatenate(
        [jnp.asarray(w_scale).T, jnp.asarray(w_shift).T], axis=1
    ).astype(compute_dtype)
    b_fused = jnp.concatenate(
        [jnp.asarray(b_scale), jnp.asarray(b_shift)]
    ).reshape(1, 2 * D).astype(jnp.float32)
    return w_fused, b_fused


def _pick_block_b(B):
    # MXU-M aligned tile: 128 fills the v5e MXU; 256+ fills v6e/v7x.  Capped so
    # the x/out double buffers stay small next to the resident fused weight.
    if B <= 128:
        return 128
    if B <= 1024:
        return 256
    return 512


def film_forward(x, w_fused, b_fused, *, block_b=None):
    """x: (B, D).  w_fused: (D, 2D), b_fused: (1, 2D) from prepare_film_params."""
    B, D = x.shape
    assert w_fused.shape == (D, 2 * D) and b_fused.shape == (1, 2 * D)
    if block_b is None:
        block_b = _pick_block_b(B)

    compute_dtype = w_fused.dtype
    out_dtype = x.dtype

    # Feed the MXU its native dtype; pad the batch to a whole number of tiles
    # (padded rows compute garbage and are sliced off below).
    x_c = x.astype(compute_dtype)
    grid_b = pl.cdiv(B, block_b)
    B_pad = grid_b * block_b
    if B_pad != B:
        x_c = jnp.pad(x_c, ((0, B_pad - B), (0, 0)))

    isz = lambda dt: jnp.dtype(dt).itemsize
    # Resident (double-buffered) fused weight/bias + double-buffered x/out
    # tiles + in-kernel f32 intermediates, with 2x headroom.
    vmem_needed = (
        2 * w_fused.size * isz(compute_dtype)
        + 2 * b_fused.size * 4
        + 2 * block_b * D * isz(compute_dtype)
        + 2 * block_b * D * isz(out_dtype)
        + 2 * block_b * 3 * D * 4
    )
    vmem_limit = int(min(max(2 * vmem_needed, 32 << 20), 64 << 20))

    out = pl.pallas_call(
        film_kernel,
        out_shape=jax.ShapeDtypeStruct((B_pad, D), out_dtype),
        grid_spec=pltpu.PrefetchScalarGridSpec(
            num_scalar_prefetch=0,
            grid=(grid_b,),
            in_specs=[
                pl.BlockSpec((block_b, D), lambda i: (i, 0)),   # x tile (pipelined)
                pl.BlockSpec((D, 2 * D), lambda i: (0, 0)),     # fused W (resident)
                pl.BlockSpec((1, 2 * D), lambda i: (0, 0)),     # fused bias
            ],
            out_specs=pl.BlockSpec((block_b, D), lambda i: (i, 0)),
        ),
        compiler_params=pltpu.CompilerParams(
            dimension_semantics=("parallel",),
            vmem_limit_bytes=vmem_limit,
        ),
    )(x_c, w_fused, b_fused)

    return out[:B] if B_pad != B else out


def _torch_linear_init(key, fan_in, fan_out):
    """Deterministic nn.Linear-style init: U(-1/sqrt(fan_in), 1/sqrt(fan_in))."""
    kw, kb = jax.random.split(key)
    bound = 1.0 / math.sqrt(fan_in)
    w = jax.random.uniform(kw, (fan_out, fan_in), jnp.float32, -bound, bound)
    b = jax.random.uniform(kb, (fan_out,), jnp.float32, -bound, bound)
    return w, b


if __name__ == "__main__":
    # Small shapes consistent with the module: batch=8, embed_dim=128
    # (embed_dim a multiple of 128 keeps the lane axis tile-aligned).
    B, D = 8, 128
    key = jax.random.PRNGKey(0)
    k_x, k_scale, k_shift = jax.random.split(key, 3)

    x = jax.random.normal(k_x, (B, D), jnp.float32)
    w_scale, b_scale = _torch_linear_init(k_scale, D, D)
    w_shift, b_shift = _torch_linear_init(k_shift, D, D)

    # One-time parameter prep (transpose + fuse + bf16 cast), out of hot path.
    w_fused, b_fused = prepare_film_params(w_scale, b_scale, w_shift, b_shift)

    out = film_forward(x, w_fused, b_fused)
    out = jax.block_until_ready(out)
    assert out.shape == (B, D) and out.dtype == x.dtype

    # (1) Tight check vs. a pure-JAX reference using identical bf16 operands
    #     and f32 accumulation (same math as the kernel).
    x_c = x.astype(jnp.bfloat16)
    y = jnp.dot(x_c, w_fused, preferred_element_type=jnp.float32) + b_fused
    ref_same = (x_c.astype(jnp.float32) * y[:, :D] + y[:, D:]).astype(x.dtype)
    assert jnp.allclose(out, ref_same, atol=5e-3, rtol=5e-3), \
        "mismatch vs matched bf16 reference"

    # (2) Looser semantic check vs. the full-f32 PyTorch-style reference.
    scale_ref = x @ w_scale.T + b_scale
    shift_ref = x @ w_shift.T + b_shift
    ref_f32 = x * scale_ref + shift_ref
    assert jnp.allclose(out, ref_f32, atol=1e-1, rtol=1e-1), \
        "mismatch vs f32 reference"

    # TODO(synk): per_label=True path (flatten to num_classes*embed_dim, same
    # fused-matmul form at D=num_classes*embed_dim, reshape back) needs
    # K-tiling to fit v7x VMEM; not exercised at these synthetic shapes.

    print("KERNEL_OK")
</pallas_src>

<mosaic_0001>
module attributes {stable_mosaic.version = 11 : i64} {
  func.func @film_kernel(%arg0: i32, %arg1: memref<128x128xbf16, #tpu.memory_space<vmem>>, %arg2: memref<128x256xbf16, #tpu.memory_space<vmem>>, %arg3: memref<1x256xf32, #tpu.memory_space<vmem>>, %arg4: memref<128x128xf32, #tpu.memory_space<vmem>>) attributes {dimension_semantics = [#tpu.dimension_semantics<parallel>], iteration_bounds = array<i64: 1>, scalar_prefetch = 0 : i64, scratch_operands = 0 : i64, tpu.core_type = #tpu.core_type<tc>, window_params = [{transform_indices = @transform_0, window_bounds = array<i64: 128, 128>}, {pipeline_mode = #tpu.pipeline_mode<synchronous>, transform_indices = @transform_1, window_bounds = array<i64: 128, 256>}, {pipeline_mode = #tpu.pipeline_mode<synchronous>, transform_indices = @transform_2, window_bounds = array<i64: 1, 256>}, {transform_indices = @transform_3, window_bounds = array<i64: 128, 128>}]} {
    %c0 = arith.constant 0 : index
    %c0_0 = arith.constant 0 : index
    %0 = vector.load %arg1[%c0, %c0_0] : memref<128x128xbf16, #tpu.memory_space<vmem>>, vector<128x128xbf16>
    %c0_1 = arith.constant 0 : index
    %c0_2 = arith.constant 0 : index
    %1 = vector.load %arg2[%c0_1, %c0_2] : memref<128x256xbf16, #tpu.memory_space<vmem>>, vector<128x256xbf16>
    %cst = arith.constant dense<0.000000e+00> : vector<128x256xf32>
    %2 = tpu.matmul %0, %1, %cst {dimension_numbers = #tpu.dot_dimension_numbers<[1], [0], [0], [1], [0, 0, 1, 1], [], []>} : vector<128x128xbf16>, vector<128x256xbf16>, vector<128x256xf32> -> vector<128x256xf32>
    %c0_3 = arith.constant 0 : index
    %c0_4 = arith.constant 0 : index
    %3 = vector.load %arg3[%c0_3, %c0_4] : memref<1x256xf32, #tpu.memory_space<vmem>>, vector<1x256xf32>
    %4 = vector.broadcast %3 : vector<1x256xf32> to vector<128x256xf32>
    %5 = arith.addf %2, %4 : vector<128x256xf32>
    %6 = vector.extract_strided_slice %5 {offsets = [0, 0], sizes = [128, 128], strides = [1, 1]} : vector<128x256xf32> to vector<128x128xf32>
    %7 = vector.extract_strided_slice %5 {offsets = [0, 128], sizes = [128, 128], strides = [1, 1]} : vector<128x256xf32> to vector<128x128xf32>
    %8 = arith.extf %0 : vector<128x128xbf16> to vector<128x128xf32>
    %9 = arith.mulf %8, %6 : vector<128x128xf32>
    %10 = arith.addf %9, %7 : vector<128x128xf32>
    %c0_5 = arith.constant 0 : index
    %c0_6 = arith.constant 0 : index
    %11 = vector.load %arg4[%c0_5, %c0_6] : memref<128x128xf32, #tpu.memory_space<vmem>>, vector<128x128xf32>
    tpu.vector_store %arg4[%c0_5, %c0_6], %10 {strides = array<i32>} : memref<128x128xf32, #tpu.memory_space<vmem>>, vector<128x128xf32>,
    return
  }
  func.func @transform_0(%arg0: i32) -> (i32, i32) {
    %c0_i32 = arith.constant 0 : i32
    %c0_i32_0 = arith.constant 0 : i32
    return %arg0, %c0_i32 : i32, i32
  }
  func.func @transform_1(%arg0: i32) -> (i32, i32) {
    %c0_i32 = arith.constant 0 : i32
    %c0_i32_0 = arith.constant 0 : i32
    %c0_i32_1 = arith.constant 0 : i32
    return %c0_i32, %c0_i32_0 : i32, i32
  }
  func.func @transform_2(%arg0: i32) -> (i32, i32) {
    %c0_i32 = arith.constant 0 : i32
    %c0_i32_0 = arith.constant 0 : i32
    %c0_i32_1 = arith.constant 0 : i32
    return %c0_i32, %c0_i32_0 : i32, i32
  }
  func.func @transform_3(%arg0: i32) -> (i32, i32) {
    %c0_i32 = arith.constant 0 : i32
    %c0_i32_0 = arith.constant 0 : i32
    return %arg0, %c0_i32 : i32, i32
  }
}

</mosaic_0001>

<llo_original>
// kernel: tpu_custom_call.1
$region0: #{tpu_custom_call.1}
  #allocation0 [shape = 'u32[]', space=smem, size = 0x4, offset = 0x4, fixed_abs, tag = 'smem constant byte address 0x4 - core index']
  #allocation1 [shape = 'u32[72,128]{1,0:T(1,128)}', space=vmem, size = 0x9000, scoped, tag = 'internal scratch']
  %s0 = inlined_call_operand.hbm [shape: bf16[128,128], index: 0, kind: input, shape index: {}]
  %s1 = inlined_call_operand.hbm [shape: bf16[128,256], index: 1, kind: input, shape index: {}]
  %s2 = inlined_call_operand.hbm [shape: f32[1,256], index: 2, kind: input, shape index: {}]
  %s3 = inlined_call_operand.hbm [shape: f32[128,128], index: 3, kind: output, shape index: {}]
  %s4 = sld [smem:[#allocation0]]
  $region34: #{tpu_custom_call.1} parent=0
    _
  %s6 = ssub.s32 1, %s4
  %s7 = scalar_select 0, %s6, %s4
  $region1: #{tpu_custom_call.1} parent=0
    #allocation2 [shape = 'u8[32768]{0}', space=vmem, size = 0x8000, scoped, tag = 'input window, operand 0, single buffered']
    #allocation3 [shape = 's32[1]{0}', space=sflag, size = 0x4, scoped, tag = 'scoped memory for tpu_custom_call.1']
    #allocation4 [shape = 's32[1]{0}', space=sflag, size = 0x4, scoped, tag = 'scoped memory for tpu_custom_call.1']
    #allocation5 [shape = 'u8[65536]{0}', space=vmem, size = 0x10000, scoped, tag = 'input window, operand 1, single buffered']
    #allocation6 [shape = 's32[1]{0}', space=sflag, size = 0x4, scoped, tag = 'scoped memory for tpu_custom_call.1']
    #allocation7 [shape = 'u8[1024]{0}', space=vmem, size = 0x400, scoped, tag = 'input window, operand 2, single buffered']
    #allocation8 [shape = 'u8[65536]{0}', space=vmem, size = 0x10000, scoped, tag = 'output window, operand 0, single buffered']
    %8 = vsyncpa [#allocation3], 0
    %9 = vsyncpa [#allocation6], 0
    %10 = vsyncpa [#allocation4], 0
    // Predicated region
    $region2: #{tpu_custom_call.1} parent=1 // pred_check
      _
    $region3: #{tpu_custom_call.1} parent=1 // pred_check_branch
      %12 = sbr.rel (0) target = $region5
    $region4: #{tpu_custom_call.1} parent=1 // pred_region
      %14 = vsyncadd [#allocation3], 0
      %s15 = sshll.u32 %s0, 4
      %s16 = int_to_ptr.hbm [resolvable:$true] %s15
      %s17 = sshll.u32 [#allocation2], 4
      %s18 = int_to_ptr.vmem [resolvable:$true] %s17
      %23 = dma.hbm_to_vmem [thread:$0]  %s16, 1024, %s18, [#allocation3], 64, 64, 4
    $region5: #{tpu_custom_call.1} parent=1 // pred_fallthru
      _
    // Predicated region
    $region6: #{tpu_custom_call.1} parent=1 // pred_check
      _
    $region7: #{tpu_custom_call.1} parent=1 // pred_check_branch
      %25 = sbr.rel (0) target = $region9
    $region8: #{tpu_custom_call.1} parent=1 // pred_region
      %27 = vsyncadd [#allocation6], 0
      %s28 = sshll.u32 %s1, 4
      %s29 = int_to_ptr.hbm [resolvable:$true] %s28
      %s30 = sshll.u32 [#allocation5], 4
      %s31 = int_to_ptr.vmem [resolvable:$true] %s30
      %36 = dma.hbm_to_vmem [thread:$0]  %s29, 2048, %s31, [#allocation6], 128, 128, 8
    $region9: #{tpu_custom_call.1} parent=1 // pred_fallthru
      _
    // Predicated region
    $region10: #{tpu_custom_call.1} parent=1 // pred_check
      _
    $region11: #{tpu_custom_call.1} parent=1 // pred_check_branch
      %38 = sbr.rel (0) target = $region13
    $region12: #{tpu_custom_call.1} parent=1 // pred_region
      %40 = vsyncadd [#allocation6], 0
      %s42 = sshll.u32 %s2, 4
      %s43 = int_to_ptr.hbm [resolvable:$true] %s42
      %s44 = sshll.u32 [#allocation7], 4
      %s45 = int_to_ptr.vmem [resolvable:$true] %s44
      %47 = dma.hbm_to_vmem [thread:$0]  %s43, 32, %s45, [#allocation6]
    $region13: #{tpu_custom_call.1} parent=1 // pred_fallthru
      _
    // Predicated region
    $region14: #{tpu_custom_call.1} parent=1 // pred_check
      _
    $region15: #{tpu_custom_call.1} parent=1 // pred_check_branch
      %49 = sbr.rel (0) target = $region17
    $region16: #{tpu_custom_call.1} parent=1 // pred_region
      %51 = dma.done [#allocation3], 1024
    $region17: #{tpu_custom_call.1} parent=1 // pred_fallthru
      _
    // Predicated region
    $region18: #{tpu_custom_call.1} parent=1 // pred_check
      _
    $region19: #{tpu_custom_call.1} parent=1 // pred_check_branch
      %53 = sbr.rel (0) target = $region21
    $region20: #{tpu_custom_call.1} parent=1 // pred_region
      %55 = dma.done [#allocation6], 2048
    $region21: #{tpu_custom_call.1} parent=1 // pred_fallthru
      _
    // Predicated region
    $region22: #{tpu_custom_call.1} parent=1 // pred_check
      _
    $region23: #{tpu_custom_call.1} parent=1 // pred_check_branch
      %57 = sbr.rel (0) target = $region25
    $region24: #{tpu_custom_call.1} parent=1 // pred_region
      %59 = dma.done [#allocation6], 32
    $region25: #{tpu_custom_call.1} parent=1 // pred_fallthru
      _
    %v60 = vld [vmem:[#allocation2] sm:$0xf]
    %v61 = vld [vmem:[#allocation2 + $0x4] sm:$0xf]
    %v62 = vld [vmem:[#allocation2 + $0x8] sm:$0xf]
    %v63 = vld [vmem:[#allocation2 + $0xc] sm:$0xf]
    %v64 = vld [vmem:[#allocation2 + $0x10] sm:$0xf]
    %v65 = vld [vmem:[#allocation2 + $0x14] sm:$0xf]
    %v66 = vld [vmem:[#allocation2 + $0x18] sm:$0xf]
    %v67 = vld [vmem:[#allocation2 + $0x1c] sm:$0xf]
    %v68 = vld [vmem:[#allocation2 + $0x20] sm:$0xf]
    %v69 = vld [vmem:[#allocation2 + $0x24] sm:$0xf]
    %v70 = vld [vmem:[#allocation2 + $0x28] sm:$0xf]
    %v71 = vld [vmem:[#allocation2 + $0x2c] sm:$0xf]
    %v72 = vld [vmem:[#allocation2 + $0x30] sm:$0xf]
    %v73 = vld [vmem:[#allocation2 + $0x34] sm:$0xf]
    %v74 = vld [vmem:[#allocation2 + $0x38] sm:$0xf]
    %v75 = vld [vmem:[#allocation2 + $0x3c] sm:$0xf]
    %v76 = vld [vmem:[#allocation5] sm:$0xff]
    %v77 = vld [vmem:[#allocation5 + $0x8] sm:$0xff]
    %v78 = vld [vmem:[#allocation5 + $0x10] sm:$0xff]
    %v79 = vld [vmem:[#allocation5 + $0x18] sm:$0xff]
    %v80 = vld [vmem:[#allocation5 + $0x20] sm:$0xff]
    %v81 = vld [vmem:[#allocation5 + $0x28] sm:$0xff]
    %v82 = vld [vmem:[#allocation5 + $0x30] sm:$0xff]
    %v83 = vld [vmem:[#allocation5 + $0x38] sm:$0xff]
    %v84 = vld [vmem:[#allocation5 + $0x40] sm:$0xff]
    %v85 = vld [vmem:[#allocation5 + $0x48] sm:$0xff]
    %v86 = vld [vmem:[#allocation5 + $0x50] sm:$0xff]
    %v87 = vld [vmem:[#allocation5 + $0x58] sm:$0xff]
    %v88 = vld [vmem:[#allocation5 + $0x60] sm:$0xff]
    %v89 = vld [vmem:[#allocation5 + $0x68] sm:$0xff]
    %v90 = vld [vmem:[#allocation5 + $0x70] sm:$0xff]
    %v91 = vld [vmem:[#allocation5 + $0x78] sm:$0xff]
    %v92 = vld [vmem:[#allocation7] sm:$0x3]
    %v94 = vperm.slane %v92, 0
    %v95 = vperm.slane %v92, 1
    %v114 = vunpack.c.l.b16 %v60
    %v115 = vunpack.c.l.b16 %v61
    %v116 = vunpack.c.l.b16 %v62
    %v117 = vunpack.c.l.b16 %v63
    %v118 = vunpack.c.l.b16 %v64
    %v119 = vunpack.c.l.b16 %v65
    %v120 = vunpack.c.l.b16 %v66
    %v121 = vunpack.c.l.b16 %v67
    %v122 = vunpack.c.l.b16 %v68
    %v123 = vunpack.c.l.b16 %v69
    %v124 = vunpack.c.l.b16 %v70
    %v125 = vunpack.c.l.b16 %v71
    %v126 = vunpack.c.l.b16 %v72
    %v127 = vunpack.c.l.b16 %v73
    %v128 = vunpack.c.l.b16 %v74
    %v129 = vunpack.c.l.b16 %v75
    %v130 = vpack.c.b16 %v115, %v114
    %v131 = vpack.c.b16 %v117, %v116
    %v132 = vpack.c.b16 %v119, %v118
    %v133 = vpack.c.b16 %v121, %v120
    %v134 = vpack.c.b16 %v123, %v122
    %v135 = vpack.c.b16 %v125, %v124
    %v136 = vpack.c.b16 %v127, %v126
    %v137 = vpack.c.b16 %v129, %v128
    %v162 = vunpack.c.l.b16 %v76
    %v163 = vunpack.c.h.b16 %v76
    %v164 = vunpack.c.l.b16 %v77
    %v165 = vunpack.c.h.b16 %v77
    %v166 = vunpack.c.l.b16 %v78
    %v167 = vunpack.c.h.b16 %v78
    %v168 = vunpack.c.l.b16 %v79
    %v169 = vunpack.c.h.b16 %v79
    %v170 = vunpack.c.l.b16 %v80
    %v171 = vunpack.c.h.b16 %v80
    %v172 = vunpack.c.l.b16 %v81
    %v173 = vunpack.c.h.b16 %v81
    %v174 = vunpack.c.l.b16 %v82
    %v175 = vunpack.c.h.b16 %v82
    %v176 = vunpack.c.l.b16 %v83
    %v177 = vunpack.c.h.b16 %v83
    %v178 = vunpack.c.l.b16 %v84
    %v179 = vunpack.c.h.b16 %v84
    %v180 = vunpack.c.l.b16 %v85
    %v181 = vunpack.c.h.b16 %v85
    %v182 = vunpack.c.l.b16 %v86
    %v183 = vunpack.c.h.b16 %v86
    %v184 = vunpack.c.l.b16 %v87
    %v185 = vunpack.c.h.b16 %v87
    %v186 = vunpack.c.l.b16 %v88
    %v187 = vunpack.c.h.b16 %v88
    %v188 = vunpack.c.l.b16 %v89
    %v189 = vunpack.c.h.b16 %v89
    %v190 = vunpack.c.l.b16 %v90
    %v191 = vunpack.c.h.b16 %v90
    %v192 = vunpack.c.l.b16 %v91
    %v193 = vunpack.c.h.b16 %v91
    %v194 = vpack.c.b16 %v164, %v162
    %v195 = vpack.c.b16 %v165, %v163
    %v196 = vpack.c.b16 %v168, %v166
    %v197 = vpack.c.b16 %v169, %v167
    %v198 = vpack.c.b16 %v172, %v170
    %v199 = vpack.c.b16 %v173, %v171
    %v200 = vpack.c.b16 %v176, %v174
    %v201 = vpack.c.b16 %v177, %v175
    %v202 = vpack.c.b16 %v180, %v178
    %v203 = vpack.c.b16 %v181, %v179
    %v204 = vpack.c.b16 %v184, %v182
    %v205 = vpack.c.b16 %v185, %v183
    %v206 = vpack.c.b16 %v188, %v186
    %v207 = vpack.c.b16 %v189, %v187
    %v208 = vpack.c.b16 %v192, %v190
    %v209 = vpack.c.b16 %v193, %v191
    %226 = vmatpush.bf16.msra.mxu0 %v208
    %227 = vmatpush.bf16.msra.mxu0 %v206
    %228 = vmatpush.bf16.msra.mxu0 %v204
    %229 = vmatpush.bf16.msra.mxu0 %v202
    %230 = vmatpush.bf16.msra.mxu0 %v200
    %231 = vmatpush.bf16.msra.mxu0 %v198
    %232 = vmatpush.bf16.msra.mxu0 %v196
    %233 = vmatpush.bf16.msra.mxu0 %v194
    %234 = vmatmul.bf16.gmra.mxu0 %v130
    %v235 = vpop.f32.mrf.mxu0
    %v236 = vadd.f32 %v94, %v235
    %v237 = vpop.f32.mrf.mxu0
    %v238 = vadd.f32 %v94, %v237
    %239 = vmatmul.bf16.gmra.mxu0 %v131
    %v240 = vpop.f32.mrf.mxu0
    %v241 = vadd.f32 %v94, %v240
    %v242 = vpop.f32.mrf.mxu0
    %v243 = vadd.f32 %v94, %v242
    %244 = vmatmul.bf16.gmra.mxu0 %v132
    %v245 = vpop.f32.mrf.mxu0
    %v246 = vadd.f32 %v94, %v245
    %v247 = vpop.f32.mrf.mxu0
    %v248 = vadd.f32 %v94, %v247
    %249 = vmatmul.bf16.gmra.mxu0 %v133
    %v250 = vpop.f32.mrf.mxu0
    %v251 = vadd.f32 %v94, %v250
    %v252 = vpop.f32.mrf.mxu0
    %v253 = vadd.f32 %v94, %v252
    %254 = vmatmul.bf16.gmra.mxu0 %v134
    %v255 = vpop.f32.mrf.mxu0
    %v256 = vadd.f32 %v94, %v255
    %v257 = vpop.f32.mrf.mxu0
    %v258 = vadd.f32 %v94, %v257
    %259 = vmatmul.bf16.gmra.mxu0 %v135
    %v260 = vpop.f32.mrf.mxu0
    %v261 = vadd.f32 %v94, %v260
    %v262 = vpop.f32.mrf.mxu0
    %v263 = vadd.f32 %v94, %v262
    %264 = vmatmul.bf16.gmra.mxu0 %v136
    %v265 = vpop.f32.mrf.mxu0
    %v266 = vadd.f32 %v94, %v265
    %v267 = vpop.f32.mrf.mxu0
    %v268 = vadd.f32 %v94, %v267
    %269 = vmatmul.bf16.gmra.mxu0 %v137
    %v270 = vpop.f32.mrf.mxu0
    %v271 = vadd.f32 %v94, %v270
    %v272 = vpop.f32.mrf.mxu0
    %v273 = vadd.f32 %v94, %v272
    %274 = vdwg.mxu0
    %275 = vmatpush.bf16.msra.mxu0 %v209
    %276 = vmatpush.bf16.msra.mxu0 %v207
    %277 = vmatpush.bf16.msra.mxu0 %v205
    %278 = vmatpush.bf16.msra.mxu0 %v203
    %279 = vmatpush.bf16.msra.mxu0 %v201
    %280 = vmatpush.bf16.msra.mxu0 %v199
    %281 = vmatpush.bf16.msra.mxu0 %v197
    %282 = vmatpush.bf16.msra.mxu0 %v195
    %283 = vmatmul.bf16.gmra.mxu0 %v130
    %v284 = vpop.f32.mrf.mxu0
    %v285 = vadd.f32 %v95, %v284
    %v286 = vpop.f32.mrf.mxu0
    %v287 = vadd.f32 %v95, %v286
    %288 = vmatmul.bf16.gmra.mxu0 %v131
    %v289 = vpop.f32.mrf.mxu0
    %v290 = vadd.f32 %v95, %v289
    %v291 = vpop.f32.mrf.mxu0
    %v292 = vadd.f32 %v95, %v291
    %293 = vmatmul.bf16.gmra.mxu0 %v132
    %v294 = vpop.f32.mrf.mxu0
    %v295 = vadd.f32 %v95, %v294
    %v296 = vpop.f32.mrf.mxu0
    %v297 = vadd.f32 %v95, %v296
    %298 = vmatmul.bf16.gmra.mxu0 %v133
    %v299 = vpop.f32.mrf.mxu0
    %v300 = vadd.f32 %v95, %v299
    %v301 = vpop.f32.mrf.mxu0
    %v302 = vadd.f32 %v95, %v301
    %303 = vmatmul.bf16.gmra.mxu0 %v134
    %v304 = vpop.f32.mrf.mxu0
    %v305 = vadd.f32 %v95, %v304
    %v306 = vpop.f32.mrf.mxu0
    %v307 = vadd.f32 %v95, %v306
    %308 = vmatmul.bf16.gmra.mxu0 %v135
    %v309 = vpop.f32.mrf.mxu0
    %v310 = vadd.f32 %v95, %v309
    %v311 = vpop.f32.mrf.mxu0
    %v312 = vadd.f32 %v95, %v311
    %313 = vmatmul.bf16.gmra.mxu0 %v136
    %v314 = vpop.f32.mrf.mxu0
    %v315 = vadd.f32 %v95, %v314
    %v316 = vpop.f32.mrf.mxu0
    %v317 = vadd.f32 %v95, %v316
    %318 = vmatmul.bf16.gmra.mxu0 %v137
    %v319 = vpop.f32.mrf.mxu0
    %v320 = vadd.f32 %v95, %v319
    %v321 = vpop.f32.mrf.mxu0
    %v322 = vadd.f32 %v95, %v321
    %323 = vdwg.mxu0
    %v324 = vunpack.c.l.bf16 %v60
    %v325 = vunpack.c.l.bf16 %v61
    %v326 = vunpack.c.l.bf16 %v62
    %v327 = vunpack.c.l.bf16 %v63
    %v328 = vunpack.c.l.bf16 %v64
    %v329 = vunpack.c.l.bf16 %v65
    %v330 = vunpack.c.l.bf16 %v66
    %v331 = vunpack.c.l.bf16 %v67
    %v332 = vunpack.c.l.bf16 %v68
    %v333 = vunpack.c.l.bf16 %v69
    %v334 = vunpack.c.l.bf16 %v70
    %v335 = vunpack.c.l.bf16 %v71
    %v336 = vunpack.c.l.bf16 %v72
    %v337 = vunpack.c.l.bf16 %v73
    %v338 = vunpack.c.l.bf16 %v74
    %v339 = vunpack.c.l.bf16 %v75
    %v340 = vmul.f32 %v324, %v236
    %v341 = vmul.f32 %v325, %v238
    %v342 = vmul.f32 %v326, %v241
    %v343 = vmul.f32 %v327, %v243
    %v344 = vmul.f32 %v328, %v246
    %v345 = vmul.f32 %v329, %v248
    %v346 = vmul.f32 %v330, %v251
    %v347 = vmul.f32 %v331, %v253
    %v348 = vmul.f32 %v332, %v256
    %v349 = vmul.f32 %v333, %v258
    %v350 = vmul.f32 %v334, %v261
    %v351 = vmul.f32 %v335, %v263
    %v352 = vmul.f32 %v336, %v266
    %v353 = vmul.f32 %v337, %v268
    %v354 = vmul.f32 %v338, %v271
    %v355 = vmul.f32 %v339, %v273
    %v356 = vadd.f32 %v340, %v285
    %v357 = vadd.f32 %v341, %v287
    %v358 = vadd.f32 %v342, %v290
    %v359 = vadd.f32 %v343, %v292
    %v360 = vadd.f32 %v344, %v295
    %v361 = vadd.f32 %v345, %v297
    %v362 = vadd.f32 %v346, %v300
    %v363 = vadd.f32 %v347, %v302
    %v364 = vadd.f32 %v348, %v305
    %v365 = vadd.f32 %v349, %v307
    %v366 = vadd.f32 %v350, %v310
    %v367 = vadd.f32 %v351, %v312
    %v368 = vadd.f32 %v352, %v315
    %v369 = vadd.f32 %v353, %v317
    %v370 = vadd.f32 %v354, %v320
    %v371 = vadd.f32 %v355, %v322
    %372 = vst [vmem:[#allocation8] sm:$0xff] %v356
    %373 = vst [vmem:[#allocation8 + $0x8] sm:$0xff] %v357
    %374 = vst [vmem:[#allocation8 + $0x10] sm:$0xff] %v358
    %375 = vst [vmem:[#allocation8 + $0x18] sm:$0xff] %v359
    %376 = vst [vmem:[#allocation8 + $0x20] sm:$0xff] %v360
    %377 = vst [vmem:[#allocation8 + $0x28] sm:$0xff] %v361
    %378 = vst [vmem:[#allocation8 + $0x30] sm:$0xff] %v362
    %379 = vst [vmem:[#allocation8 + $0x38] sm:$0xff] %v363
    %380 = vst [vmem:[#allocation8 + $0x40] sm:$0xff] %v364
    %381 = vst [vmem:[#allocation8 + $0x48] sm:$0xff] %v365
    %382 = vst [vmem:[#allocation8 + $0x50] sm:$0xff] %v366
    %383 = vst [vmem:[#allocation8 + $0x58] sm:$0xff] %v367
    %384 = vst [vmem:[#allocation8 + $0x60] sm:$0xff] %v368
    %385 = vst [vmem:[#allocation8 + $0x68] sm:$0xff] %v369
    %386 = vst [vmem:[#allocation8 + $0x70] sm:$0xff] %v370
    %387 = vst [vmem:[#allocation8 + $0x78] sm:$0xff] %v371
    // Predicated region
    $region26: #{tpu_custom_call.1} parent=1 // pred_check
      _
    $region27: #{tpu_custom_call.1} parent=1 // pred_check_branch
      %389 = sbr.rel (0) target = $region29
    $region28: #{tpu_custom_call.1} parent=1 // pred_region
      %391 = vsyncadd [#allocation4], 0
      %s392 = sshll.u32 [#allocation8], 4
      %s393 = int_to_ptr.vmem [resolvable:$true] %s392
      %s394 = sshll.u32 %s3, 4
      %s395 = int_to_ptr.hbm [resolvable:$true] %s394
      %400 = dma.vmem_to_hbm [thread:$0]  %s393, 2048, %s395, [#allocation4], 128, 128, 8
    $region29: #{tpu_custom_call.1} parent=1 // pred_fallthru
      _
    // Predicated region
    $region30: #{tpu_custom_call.1} parent=1 // pred_check
      _
    $region31: #{tpu_custom_call.1} parent=1 // pred_check_branch
      %402 = sbr.rel (0) target = $region33
    $region32: #{tpu_custom_call.1} parent=1 // pred_region
      %404 = dma.done [#allocation4], 2048
    $region33: #{tpu_custom_call.1} parent=1 // pred_fallthru
      _
    %405 = vsyncpa [#allocation3], 1
    %406 = vsyncpa [#allocation6], 1
    %407 = vsyncpa [#allocation4], 1

</llo_original>
